<compile_context>
chip_gen: v5e
topology: v5e:2x2
jax: 0.10.0
libtpu: 0.0.40
codegen_flags: <defaults>
</compile_context>

<pallas_src>
import jax
import jax.numpy as jnp
from jax.experimental import pallas as pl
from jax.experimental.pallas import tpu as pltpu

_LANES = 128      # vreg lane width (last/fast axis)
_SUBLANES = 8     # f32 sublane tile (second-to-last axis)


def _passthrough_kernel(z_ref, o_ref):
    # Identity over the full lane-dense VMEM block (unmasked vld/vst).
    o_ref[...] = z_ref[...]


def _lane_dense_slab(x):
    """Flatten x into a lane-dense (rows, 128) slab, rows padded to 8.

    Returns (slab, original_element_count).  Padding to a multiple of
    (8, 128) keeps full vregs and keeps the shape divisible if a
    block_shape/grid is ever added.
    """
    total = x.size                       # static under jit
    tile = _SUBLANES * _LANES
    padded_total = ((total + tile - 1) // tile) * tile
    flat = x.reshape(-1)
    if padded_total != total:
        flat = jnp.pad(flat, (0, padded_total - total))
    return flat.reshape(padded_total // _LANES, _LANES), total


@jax.jit
def _run_passthrough_demo(z):
    """Demonstration-only Pallas call (NOT used by HierarchySubGNN.forward).

    Pad/reshape to a lane-dense (8k, 128) slab, run a single grid-less VMEM
    passthrough, and slice back to the original shape — all fused under jit.
    """
    slab, total = _lane_dense_slab(z)
    out = pl.pallas_call(
        _passthrough_kernel,
        out_shape=jax.ShapeDtypeStruct(slab.shape, slab.dtype),
        in_specs=[pl.BlockSpec(memory_space=pltpu.MemorySpace.VMEM)],
        out_specs=pl.BlockSpec(memory_space=pltpu.MemorySpace.VMEM),
    )(slab)
    return out.reshape(-1)[:total].reshape(z.shape)


class HierarchySubGNN:
    """JAX port of the PyTorch stub.

    The reference __init__ only stores `config`; the reference forward does
    no work and returns None.  No Pallas kernel runs on this path.
    """

    def __init__(self, config):
        self.config = config

    def forward(self, z, h, masks, edges):
        # Exact semantics of the PyTorch stub: no computation, returns None.
        # TODO(synk): when real SubGNN message passing is specified, implement
        # it as ONE fused kernel over (B*N, H_pad=128) slabs (mask + adjacency
        # aggregation on the VPU for N=8, MXU only once M,N >= 128).
        return None

    __call__ = forward


if __name__ == "__main__":
    key = jax.random.PRNGKey(0)
    kz, kh, km, ke = jax.random.split(key, 4)

    batch, nodes, hidden = 2, 8, 32
    z = jax.random.normal(kz, (batch, nodes, hidden), dtype=jnp.float32)
    h = jax.random.normal(kh, (batch, nodes, hidden), dtype=jnp.float32)
    masks = (jax.random.uniform(km, (batch, nodes)) > 0.5).astype(jnp.float32)
    edges = (jax.random.uniform(ke, (batch, nodes, nodes)) > 0.5).astype(
        jnp.float32
    )

    # Demonstration Pallas kernel (lane-dense, (8,128)-padded, jitted, no
    # aliasing) — exercised once here, never from forward().
    z_out = _run_passthrough_demo(z)
    jax.block_until_ready(z_out)
    assert z_out.shape == z.shape and z_out.dtype == z.dtype
    assert bool(jnp.allclose(z_out, z)), "passthrough kernel mismatch"

    # Exact forward semantics: returns None.
    model = HierarchySubGNN(config={})
    out = model(z, h, masks, edges)
    assert out is None

    print("KERNEL_OK")
</pallas_src>

<mosaic_0001>
module attributes {stable_mosaic.version = 11 : i64} {
  func.func @_passthrough_kernel(%arg0: memref<8x128xf32, #tpu.memory_space<vmem>>, %arg1: memref<8x128xf32, #tpu.memory_space<vmem>>) attributes {dimension_semantics = [], scalar_prefetch = 0 : i64, scratch_operands = 0 : i64, tpu.core_type = #tpu.core_type<tc>} {
    %c0 = arith.constant 0 : index
    %c0_0 = arith.constant 0 : index
    %0 = vector.load %arg0[%c0, %c0_0] : memref<8x128xf32, #tpu.memory_space<vmem>>, vector<8x128xf32>
    %c0_1 = arith.constant 0 : index
    %c0_2 = arith.constant 0 : index
    %1 = vector.load %arg1[%c0_1, %c0_2] : memref<8x128xf32, #tpu.memory_space<vmem>>, vector<8x128xf32>
    tpu.vector_store %arg1[%c0_1, %c0_2], %0 {strides = array<i32>} : memref<8x128xf32, #tpu.memory_space<vmem>>, vector<8x128xf32>,
    return
  }
}

</mosaic_0001>

<llo_original>
// kernel: _run_passthrough_demo.1
$region0: #{_run_passthrough_demo.1}
  #allocation0 [shape = 'u32[]', space=smem, size = 0x4, offset = 0x4, fixed_abs, tag = 'smem constant byte address 0x4 - core index']
  #allocation1 [shape = 'u32[72,128]{1,0:T(1,128)}', space=vmem, size = 0x9000, scoped, tag = 'internal scratch']
  %s0 = inlined_call_operand.vmem [shape: f32[8,128], index: 0, kind: input, shape index: {}]
  %s1 = inlined_call_operand.vmem [shape: f32[8,128], index: 1, kind: output, shape index: {}]
  %s2 = sld [smem:[#allocation0]]
  $region14: #{_run_passthrough_demo.1} parent=0
    _
  %s4 = ssub.s32 1, %s2
  %s5 = scalar_select 0, %s4, %s2
  // Predicated region
  $region2: #{_run_passthrough_demo.1} parent=0 // pred_check
    _
  $region3: #{_run_passthrough_demo.1} parent=0 // pred_check_branch
    %7 = sbr.rel (0) target = $region5
  $region4: #{_run_passthrough_demo.1} parent=0 // pred_region
    _
  $region5: #{_run_passthrough_demo.1} parent=0 // pred_fallthru
    _
  %v8 = vld [vmem:[%s0] sm:$0xff]
  %9 = vst [vmem:[%s1] sm:$0xff] %v8
  // Predicated region
  $region6: #{_run_passthrough_demo.1} parent=0 // pred_check
    _
  $region7: #{_run_passthrough_demo.1} parent=0 // pred_check_branch
    %11 = sbr.rel (0) target = $region9
  $region8: #{_run_passthrough_demo.1} parent=0 // pred_region
    _
  $region9: #{_run_passthrough_demo.1} parent=0 // pred_fallthru
    _
  // Predicated region
  $region10: #{_run_passthrough_demo.1} parent=0 // pred_check
    _
  $region11: #{_run_passthrough_demo.1} parent=0 // pred_check_branch
    %13 = sbr.rel (0) target = $region13
  $region12: #{_run_passthrough_demo.1} parent=0 // pred_region
    _
  $region13: #{_run_passthrough_demo.1} parent=0 // pred_fallthru
    _

</llo_original>
